<compile_context>
chip_gen: v7x
topology: tpu7x:2x2x1
jax: 0.10.0
libtpu: 0.0.40
codegen_flags: <defaults>
</compile_context>

<pallas_src>
import functools

import jax
import jax.numpy as jnp
from jax import lax
from jax.experimental import pallas as pl
from jax.experimental.pallas import tpu as pltpu


def _linear_kernel(x_ref, w_ref, b_ref, o_ref):
    """classifier only: y = x @ W^T + b, W kept in [num_labels, hidden] layout."""
    x = x_ref[...]
    y = lax.dot_general(
        x.astype(jnp.bfloat16),
        w_ref[...].astype(jnp.bfloat16),
        dimension_numbers=(((1,), (1,)), ((), ())),   # contract hidden with hidden
        preferred_element_type=jnp.float32,
    )
    o_ref[...] = (y + b_ref[...].astype(jnp.float32)).astype(o_ref.dtype)


def _dropout_linear_kernel(keep_threshold, scale, x_ref, bits_ref, w_ref, b_ref, o_ref):
    """dropout (integer-threshold mask + scale) fused with the classifier matmul."""
    x = x_ref[...]
    # keep with prob (1 - p):  P(bits >= p * 2^32) = 1 - p
    keep = bits_ref[...] >= jnp.uint32(keep_threshold)
    x = jnp.where(keep, x * jnp.asarray(scale, x.dtype), jnp.zeros_like(x))
    y = lax.dot_general(
        x.astype(jnp.bfloat16),
        w_ref[...].astype(jnp.bfloat16),
        dimension_numbers=(((1,), (1,)), ((), ())),
        preferred_element_type=jnp.float32,
    )
    o_ref[...] = (y + b_ref[...].astype(jnp.float32)).astype(o_ref.dtype)


@functools.partial(jax.jit, static_argnames=("dropout",))
def scan_model_forward(feature, weight, bias, *, dropout=None, rng_key=None):
    """ScanModel.forward.

    feature: [B, H]; weight: [num_labels, H] (PyTorch Linear layout); bias: [num_labels].
    dropout: static Python float or None; rng_key required when dropout is enabled.
    """
    B, H = feature.shape
    L = weight.shape[0]
    b_2d = bias.reshape(1, L)

    # Batch tile: large enough to amortize per-grid-step overhead and pipeline
    # the feature DMA, small enough to double-buffer inside v7x's 64 MiB VMEM.
    TB = B if B <= 512 else 512
    grid = (pl.cdiv(B, TB),)

    x_spec = pl.BlockSpec((TB, H), lambda i: (i, 0))
    bits_spec = pl.BlockSpec((TB, H), lambda i: (i, 0))
    w_spec = pl.BlockSpec((L, H), lambda i: (0, 0))    # resident across grid
    b_spec = pl.BlockSpec((1, L), lambda i: (0, 0))    # resident across grid
    o_spec = pl.BlockSpec((TB, L), lambda i: (i, 0))

    # Explicit VMEM budget: double-buffered x/out tiles + resident weight/bias.
    itm = jnp.dtype(feature.dtype).itemsize
    est = (2 * TB * H * itm
           + 2 * TB * L * itm
           + L * H * jnp.dtype(weight.dtype).itemsize
           + 4 * L)
    if dropout is not None and dropout > 0.0:
        est += 2 * TB * H * 4                          # uint32 random-bits tile
    vmem_limit = int(min(64 * 2 ** 20, max(32 * 2 ** 20, 2 * est)))

    cparams = pltpu.CompilerParams(
        dimension_semantics=("parallel",),             # shard batch tiles across TCs (v7x)
        vmem_limit_bytes=vmem_limit,
    )
    out_shape = jax.ShapeDtypeStruct((B, L), feature.dtype)

    if dropout is None or dropout == 0.0:
        return pl.pallas_call(
            _linear_kernel,
            out_shape=out_shape,
            grid_spec=pltpu.PrefetchScalarGridSpec(
                num_scalar_prefetch=0,
                grid=grid,
                in_specs=[x_spec, w_spec, b_spec],
                out_specs=o_spec,
            ),
            compiler_params=cparams,
        )(feature, weight, b_2d)

    if rng_key is None:
        raise ValueError("rng_key is required when dropout is enabled")

    # TODO(synk): on hardware the random bits could come from the on-chip PRNG
    # (pltpu.prng_seed / pltpu.prng_random_bits, with program_id mixed into the
    # seed) to avoid this extra HBM read, but those primitives do not lower in
    # CPU interpret mode; entropy is generated here while the threshold/scale
    # dropout logic stays fused in the kernel.
    bits = jax.random.bits(rng_key, (B, H), dtype=jnp.uint32)
    keep_threshold = min(int(round(dropout * 2 ** 32)), 2 ** 32 - 1)
    scale = 1.0 / (1.0 - dropout)
    kernel = functools.partial(_dropout_linear_kernel, keep_threshold, scale)

    return pl.pallas_call(
        kernel,
        out_shape=out_shape,
        grid_spec=pltpu.PrefetchScalarGridSpec(
            num_scalar_prefetch=0,
            grid=grid,
            in_specs=[x_spec, bits_spec, w_spec, b_spec],
            out_specs=o_spec,
        ),
        compiler_params=cparams,
    )(feature, bits, weight, b_2d)


if __name__ == "__main__":
    # Small shapes consistent with the module: batch=8, hidden_dim=128, num_labels=16
    B, H, L = 8, 128, 16
    dropout_p = 0.1

    key = jax.random.PRNGKey(0)
    k_x, k_w, k_b, k_drop = jax.random.split(key, 4)
    feature = jax.random.normal(k_x, (B, H), dtype=jnp.float32)
    weight = jax.random.normal(k_w, (L, H), dtype=jnp.float32) * (1.0 / jnp.sqrt(H))
    bias = jax.random.normal(k_b, (L,), dtype=jnp.float32) * 0.01

    # Reference uses bf16-rounded operands (kernel feeds bf16 to the MXU, f32 accum).
    xb = feature.astype(jnp.bfloat16).astype(jnp.float32)
    wb = weight.astype(jnp.bfloat16).astype(jnp.float32)

    # --- dropout = None path ---
    out = scan_model_forward(feature, weight, bias, dropout=None)
    jax.block_until_ready(out)
    ref = xb @ wb.T + bias
    assert out.shape == (B, L)
    assert jnp.allclose(out, ref, atol=2e-3, rtol=2e-3), "no-dropout mismatch vs reference"

    # --- dropout path ---
    out_d = scan_model_forward(feature, weight, bias, dropout=dropout_p, rng_key=k_drop)
    jax.block_until_ready(out_d)
    thr = min(int(round(dropout_p * 2 ** 32)), 2 ** 32 - 1)
    bits_ref = jax.random.bits(k_drop, (B, H), dtype=jnp.uint32)
    keep_ref = bits_ref >= jnp.uint32(thr)
    x_drop = jnp.where(keep_ref, feature * jnp.float32(1.0 / (1.0 - dropout_p)), 0.0)
    ref_d = x_drop.astype(jnp.bfloat16).astype(jnp.float32) @ wb.T + bias
    assert out_d.shape == (B, L)
    assert jnp.all(jnp.isfinite(out_d))
    assert jnp.allclose(out_d, ref_d, atol=2e-3, rtol=2e-3), "dropout mismatch vs reference"

    print("KERNEL_OK")
</pallas_src>

<mosaic_0001>
module attributes {stable_mosaic.version = 11 : i64} {
  func.func @_linear_kernel(%arg0: i32, %arg1: memref<8x128xf32, #tpu.memory_space<vmem>>, %arg2: memref<16x128xf32, #tpu.memory_space<vmem>>, %arg3: memref<1x16xf32, #tpu.memory_space<vmem>>, %arg4: memref<8x16xf32, #tpu.memory_space<vmem>>) attributes {dimension_semantics = [#tpu.dimension_semantics<parallel>], iteration_bounds = array<i64: 1>, scalar_prefetch = 0 : i64, scratch_operands = 0 : i64, tpu.core_type = #tpu.core_type<tc>, window_params = [{transform_indices = @transform_0, window_bounds = array<i64: 8, 128>}, {pipeline_mode = #tpu.pipeline_mode<synchronous>, transform_indices = @transform_1, window_bounds = array<i64: 16, 128>}, {pipeline_mode = #tpu.pipeline_mode<synchronous>, transform_indices = @transform_2, window_bounds = array<i64: 1, 16>}, {transform_indices = @transform_3, window_bounds = array<i64: 8, 16>}]} {
    %c0 = arith.constant 0 : index
    %c0_0 = arith.constant 0 : index
    %0 = vector.load %arg1[%c0, %c0_0] : memref<8x128xf32, #tpu.memory_space<vmem>>, vector<8x128xf32>
    %1 = arith.truncf %0 : vector<8x128xf32> to vector<8x128xbf16>
    %c0_1 = arith.constant 0 : index
    %c0_2 = arith.constant 0 : index
    %2 = vector.load %arg2[%c0_1, %c0_2] : memref<16x128xf32, #tpu.memory_space<vmem>>, vector<16x128xf32>
    %3 = arith.truncf %2 : vector<16x128xf32> to vector<16x128xbf16>
    %cst = arith.constant dense<0.000000e+00> : vector<8x16xf32>
    %4 = tpu.matmul %1, %3, %cst {dimension_numbers = #tpu.dot_dimension_numbers<[1], [1], [0], [0], [0, 0, 1, 0], [], []>} : vector<8x128xbf16>, vector<16x128xbf16>, vector<8x16xf32> -> vector<8x16xf32>
    %c0_3 = arith.constant 0 : index
    %c0_4 = arith.constant 0 : index
    %5 = vector.load %arg3[%c0_3, %c0_4] : memref<1x16xf32, #tpu.memory_space<vmem>>, vector<1x16xf32>
    %6 = vector.broadcast %5 : vector<1x16xf32> to vector<8x16xf32>
    %7 = arith.addf %4, %6 : vector<8x16xf32>
    %c0_5 = arith.constant 0 : index
    %c0_6 = arith.constant 0 : index
    %8 = vector.load %arg4[%c0_5, %c0_6] : memref<8x16xf32, #tpu.memory_space<vmem>>, vector<8x16xf32>
    tpu.vector_store %arg4[%c0_5, %c0_6], %7 {strides = array<i32>} : memref<8x16xf32, #tpu.memory_space<vmem>>, vector<8x16xf32>,
    return
  }
  func.func @transform_0(%arg0: i32) -> (i32, i32) {
    %c0_i32 = arith.constant 0 : i32
    %c0_i32_0 = arith.constant 0 : i32
    return %arg0, %c0_i32 : i32, i32
  }
  func.func @transform_1(%arg0: i32) -> (i32, i32) {
    %c0_i32 = arith.constant 0 : i32
    %c0_i32_0 = arith.constant 0 : i32
    %c0_i32_1 = arith.constant 0 : i32
    return %c0_i32, %c0_i32_0 : i32, i32
  }
  func.func @transform_2(%arg0: i32) -> (i32, i32) {
    %c0_i32 = arith.constant 0 : i32
    %c0_i32_0 = arith.constant 0 : i32
    %c0_i32_1 = arith.constant 0 : i32
    return %c0_i32, %c0_i32_0 : i32, i32
  }
  func.func @transform_3(%arg0: i32) -> (i32, i32) {
    %c0_i32 = arith.constant 0 : i32
    %c0_i32_0 = arith.constant 0 : i32
    return %arg0, %c0_i32 : i32, i32
  }
}

</mosaic_0001>

<llo_original>
// kernel: scan_model_forward.1
$region0: #{scan_model_forward.1}
  #allocation0 [shape = 'u32[]', space=smem, size = 0x4, offset = 0x4, fixed_abs, tag = 'smem constant byte address 0x4 - core index']
  #allocation1 [shape = 'u32[144,128]{1,0:T(1,128)}', space=vmem, size = 0x12000, scoped, tag = 'internal scratch']
  %s0 = inlined_call_operand.hbm [shape: f32[8,128], index: 0, kind: input, shape index: {}]
  %s1 = inlined_call_operand.hbm [shape: f32[16,128], index: 1, kind: input, shape index: {}]
  %s2 = inlined_call_operand.vmem [shape: f32[1,16], index: 2, kind: input, shape index: {}]
  %s3 = inlined_call_operand.hbm [shape: f32[8,16], index: 3, kind: output, shape index: {}]
  %s4 = sld [smem:[#allocation0]]
  $region30: #{scan_model_forward.1} parent=0
    _
  %s6 = ssub.s32 1, %s4
  %s7 = scalar_select 0, %s6, %s4
  $region1: #{scan_model_forward.1} parent=0
    #allocation2 [shape = 'u8[4096]{0}', space=vmem, size = 0x1000, scoped, tag = 'input window, operand 0, single buffered']
    #allocation3 [shape = 's32[1]{0}', space=sflag, size = 0x4, scoped, tag = 'scoped memory for scan_model_forward.1']
    #allocation4 [shape = 's32[1]{0}', space=sflag, size = 0x4, scoped, tag = 'scoped memory for scan_model_forward.1']
    #allocation5 [shape = 'u8[8192]{0}', space=vmem, size = 0x2000, scoped, tag = 'input window, operand 1, single buffered']
    #allocation6 [shape = 's32[1]{0}', space=sflag, size = 0x4, scoped, tag = 'scoped memory for scan_model_forward.1']
    #allocation7 [shape = 'u8[4096]{0}', space=vmem, size = 0x1000, scoped, tag = 'output window, operand 0, single buffered']
    %8 = vsyncpa [#allocation3], 0
    %9 = vsyncpa [#allocation6], 0
    %10 = vsyncpa [#allocation4], 0
    // Predicated region
    $region2: #{scan_model_forward.1} parent=1 // pred_check
      _
    $region3: #{scan_model_forward.1} parent=1 // pred_check_branch
      %12 = sbr.rel (0) target = $region5
    $region4: #{scan_model_forward.1} parent=1 // pred_region
      %s14 = ssub.s32 128, 128
      %15 = vsyncadd [#allocation3], %s14
      %s17 = sshll.u32 [#allocation2], 4
      %s18 = int_to_ptr.vmem [resolvable:$true] %s17
      %20 = dma.hbm_to_vmem [thread:$0]  %s0, 128, %s18, [#allocation3]
    $region5: #{scan_model_forward.1} parent=1 // pred_fallthru
      _
    // Predicated region
    $region6: #{scan_model_forward.1} parent=1 // pred_check
      _
    $region7: #{scan_model_forward.1} parent=1 // pred_check_branch
      %22 = sbr.rel (0) target = $region9
    $region8: #{scan_model_forward.1} parent=1 // pred_region
      %s24 = ssub.s32 256, 256
      %25 = vsyncadd [#allocation6], %s24
      %s26 = sshll.u32 [#allocation5], 4
      %s27 = int_to_ptr.vmem [resolvable:$true] %s26
      %32 = dma.hbm_to_vmem [thread:$0]  %s1, 256, %s27, [#allocation6], 128, 128, 8
    $region9: #{scan_model_forward.1} parent=1 // pred_fallthru
      _
    // Predicated region
    $region10: #{scan_model_forward.1} parent=1 // pred_check
      _
    $region11: #{scan_model_forward.1} parent=1 // pred_check_branch
      %34 = sbr.rel (0) target = $region13
    $region12: #{scan_model_forward.1} parent=1 // pred_region
      _
    $region13: #{scan_model_forward.1} parent=1 // pred_fallthru
      _
    // Predicated region
    $region14: #{scan_model_forward.1} parent=1 // pred_check
      _
    $region15: #{scan_model_forward.1} parent=1 // pred_check_branch
      %36 = sbr.rel (0) target = $region17
    $region16: #{scan_model_forward.1} parent=1 // pred_region
      %37 = dma.done [#allocation3], 128
    $region17: #{scan_model_forward.1} parent=1 // pred_fallthru
      _
    // Predicated region
    $region18: #{scan_model_forward.1} parent=1 // pred_check
      _
    $region19: #{scan_model_forward.1} parent=1 // pred_check_branch
      %39 = sbr.rel (0) target = $region21
    $region20: #{scan_model_forward.1} parent=1 // pred_region
      %40 = dma.done [#allocation6], 256
    $region21: #{scan_model_forward.1} parent=1 // pred_fallthru
      _
    %v42 = vld [vmem:[#allocation2] sm:$0xff]
    %v43 = vpack.c.bf16 %v42, %v42
    %v44 = vld [vmem:[#allocation5] sm:$0xff]
    %v45 = vld [vmem:[#allocation5 + $0x8] sm:$0xff]
    %v46 = vpack.c.bf16 %v45, %v44
    %v47 = vld [vmem:[%s2] sm:$0x1]
    %v49 = vlaneseq
    %v50 = vshrl.u32 %v49, 7
    %v51 = vsub.s32 0, %v50
    %v52 = vrot.slane %v47, %v51
    %54 = vmatprep.subr.bf16.mxu0 0
    %55 = vmatpush1.bf16.xpose.msra.mxu0 %v46
    %56 = vmatprep.subr.bf16.mxu0 0
    %57 = vmatpush1.bf16.xpose.msra.mxu0 0
    %58 = vmatprep.subr.bf16.mxu0 0
    %59 = vmatpush1.bf16.xpose.msra.mxu0 0
    %60 = vmatprep.subr.bf16.mxu0 0
    %61 = vmatpush1.bf16.xpose.msra.mxu0 0
    %62 = vmatprep.subr.bf16.mxu0 0
    %63 = vmatpush1.bf16.xpose.msra.mxu0 0
    %64 = vmatprep.subr.bf16.mxu0 0
    %65 = vmatpush1.bf16.xpose.msra.mxu0 0
    %66 = vmatprep.subr.bf16.mxu0 0
    %67 = vmatpush1.bf16.xpose.msra.mxu0 0
    %68 = vmatprep.subr.bf16.mxu0 0
    %69 = vmatpush1.bf16.xpose.msra.mxu0 0
    %70 = vmatprep.subr.bf16.mxu0 0
    %71 = vmatpush1.bf16.xpose.msra.mxu0 0
    %72 = vmatprep.subr.bf16.mxu0 0
    %73 = vmatpush1.bf16.xpose.msra.mxu0 0
    %74 = vmatprep.subr.bf16.mxu0 0
    %75 = vmatpush1.bf16.xpose.msra.mxu0 0
    %76 = vmatprep.subr.bf16.mxu0 0
    %77 = vmatpush1.bf16.xpose.msra.mxu0 0
    %78 = vmatprep.subr.bf16.mxu0 0
    %79 = vmatpush1.bf16.xpose.msra.mxu0 0
    %80 = vmatprep.subr.bf16.mxu0 0
    %81 = vmatpush1.bf16.xpose.msra.mxu0 0
    %82 = vmatprep.subr.bf16.mxu0 0
    %83 = vmatpush1.bf16.xpose.msra.mxu0 0
    %84 = vmatprep.subr.bf16.mxu0 0
    %85 = vmatpush1.bf16.xpose.msra.mxu0 0
    %86 = vmatprep.mubr.bf16.mxu0 0
    %87 = vmatmul.mubr.bf16.gmra.mrb[0].mxu0 %v43
    %v88 = vpop.f32.mrb[0].mxu0
    %v89 = vadd.f32 %v52, %v88
    %v90 = vpop.f32.mrb[0].mxu0
    %v91 = vpop.f32.mrb[0].mxu0
    %v92 = vpop.f32.mrb[0].mxu0
    %93 = vdwg.mxu0
    %vm94 = vcmask 130048
    %95 = vst.msk [vmem:[#allocation7] sm:$0xff] %vm94, %v89
    // Predicated region
    $region22: #{scan_model_forward.1} parent=1 // pred_check
      _
    $region23: #{scan_model_forward.1} parent=1 // pred_check_branch
      %97 = sbr.rel (0) target = $region25
    $region24: #{scan_model_forward.1} parent=1 // pred_region
      %s99 = ssub.s32 128, 128
      %100 = vsyncadd [#allocation4], %s99
      %s102 = sshll.u32 [#allocation7], 4
      %s103 = int_to_ptr.vmem [resolvable:$true] %s102
      %105 = dma.vmem_to_hbm [thread:$0]  %s103, 128, %s3, [#allocation4]
    $region25: #{scan_model_forward.1} parent=1 // pred_fallthru
      _
    // Predicated region
    $region26: #{scan_model_forward.1} parent=1 // pred_check
      _
    $region27: #{scan_model_forward.1} parent=1 // pred_check_branch
      %107 = sbr.rel (0) target = $region29
    $region28: #{scan_model_forward.1} parent=1 // pred_region
      %108 = dma.done [#allocation4], 128
    $region29: #{scan_model_forward.1} parent=1 // pred_fallthru
      _
    %109 = vsyncpa [#allocation3], 1
    %110 = vsyncpa [#allocation6], 1
    %111 = vsyncpa [#allocation4], 1

</llo_original>
